<compile_context>
chip_gen: v6e
topology: v6e:2x2x1
jax: 0.10.0
libtpu: 0.0.40
codegen_flags: <defaults>
</compile_context>

<pallas_src>
import functools

import jax
import jax.numpy as jnp
from jax.experimental import pallas as pl
from jax.experimental.pallas import tpu as pltpu


# Tile sizing: (512, 1024) f32 = 2 MiB per tile.
_TM_MAX = 512      # sublane rows per tile (multiple of 8)
_LANE_MAX = 1024   # lane width (multiple of 128)


# --------------------------------------------------------------------------- #
# ScaleLinear (diffusion):  out = scale * x
# --------------------------------------------------------------------------- #
def _scale_kernel(x_ref, s_ref, o_ref):
    # x_ref/o_ref: (TM, W) tiles in VMEM; s_ref: (1, W) scale row (broadcast over
    # rows on the VPU — free filler on a mem-bound op, cast back to out dtype).
    o_ref[...] = (x_ref[...] * s_ref[...]).astype(o_ref.dtype)


def _choose_lane(n: int, c: int, max_lane: int = _LANE_MAX):
    """Largest multiple of 128 (<= max_lane) divisible by c, preferring >=8 rows.

    Returns None if no multiple of 128 up to max_lane is divisible by c.
    """
    best = None
    for lane in range(128, max_lane + 1, 128):
        if lane % c:
            continue
        if best is None:
            best = lane
        if pl.cdiv(n, lane) >= 8:
            best = lane
    return best


def scale_linear(x: jax.Array, scale, *, donate: bool = False) -> jax.Array:
    """out = scale * x; scale is a scalar or a 1-D vector over x's last dim."""
    orig_shape = x.shape
    n = x.size
    if n == 0:
        return x

    s = jnp.asarray(scale, dtype=jnp.float32)
    if s.ndim not in (0, 1):
        raise ValueError("scale must be a scalar or a 1-D per-channel vector")
    c = 1 if s.ndim == 0 else int(s.shape[0])
    if s.ndim == 1 and orig_shape[-1] != c:
        raise ValueError("vector scale must match x's last dimension")

    lane = _choose_lane(n, c)
    if lane is not None:
        # ---- lane-dense layout: flatten to (rows, lane), lane % c == 0 -------
        # channel(idx) = idx % c = col % c because lane % c == 0, so tiling the
        # per-channel scale across the lane reproduces the broadcast exactly.
        rows = pl.cdiv(n, lane)
        tm = min(_TM_MAX, pl.cdiv(rows, 8) * 8)
        rows_p = pl.cdiv(rows, tm) * tm          # grid divides rows_p evenly
        padded = rows_p * lane
        flat = x.reshape(-1)
        if padded != n:
            flat = jnp.pad(flat, (0, padded - n))
        x2 = flat.reshape(rows_p, lane)
        if s.ndim == 0:
            s_row = jnp.full((1, lane), s, dtype=jnp.float32)
        else:
            s_row = jnp.tile(s, lane // c).reshape(1, lane)
        width = lane
    else:
        # ---- fallback: (rows, c) layout, last dim = full channel dim ---------
        rows = n // c
        tm = min(_TM_MAX, pl.cdiv(rows, 8) * 8)
        rows_p = pl.cdiv(rows, tm) * tm
        x2 = x.reshape(rows, c)
        if rows_p != rows:
            x2 = jnp.pad(x2, ((0, rows_p - rows), (0, 0)))
        s_row = s.reshape(1, c)
        width = c
        padded = rows_p * c

    grid = (rows_p // tm,)

    out2 = pl.pallas_call(
        _scale_kernel,
        out_shape=jax.ShapeDtypeStruct((rows_p, width), x.dtype),
        grid=grid,
        in_specs=[pl.BlockSpec((tm, width), lambda i: (i, 0)),
                  pl.BlockSpec((1, width), lambda i: (0, 0))],
        out_specs=pl.BlockSpec((tm, width), lambda i: (i, 0)),
        compiler_params=pltpu.CompilerParams(
            dimension_semantics=("parallel",),   # shard across 2 TCs on v7x
        ),
        # Operand 0 is the (reshaped) x slab; aliasing it to the output halves
        # HBM footprint when the caller no longer needs x.
        input_output_aliases=({0: 0} if donate else {}),
    )(x2, s_row)

    if lane is not None:
        out = out2.reshape(-1)
        if padded != n:
            out = out[:n]
        return out.reshape(orig_shape)
    if rows_p != rows:
        out2 = out2[:rows]
    return out2.reshape(orig_shape)


# --------------------------------------------------------------------------- #
# MLP layers:  Linear + bias + {LipSwish | Tanh | none}
# --------------------------------------------------------------------------- #
def _linear_act_kernel(x_ref, w_ref, b_ref, o_ref, *, act):
    # MXU matmul with f32 accumulation; bias + activation on VPU/EUP.
    y = jnp.dot(x_ref[...], w_ref[...], preferred_element_type=jnp.float32)
    y = y + b_ref[...]                       # b_ref is (1, out): broadcast rows
    if act == "lipswish":
        y = 0.909 * (y * jax.nn.sigmoid(y))  # 0.909 * silu(y)
    elif act == "tanh":
        y = jnp.tanh(y)
    o_ref[...] = y.astype(o_ref.dtype)


def linear_act(x: jax.Array, w: jax.Array, b: jax.Array, act: str = "none"):
    """One fused Linear(+activation) layer. x:(M,K), w:(K,N), b:(N,)."""
    m, k = x.shape
    kw, n = w.shape
    assert kw == k, "weight/input size mismatch"
    b2 = jnp.asarray(b, dtype=jnp.float32).reshape(1, n)
    # Layers in this model are tiny: keep each operand as a single full-array
    # VMEM block (block_shape == array shape satisfies the (8,128) rule).
    return pl.pallas_call(
        functools.partial(_linear_act_kernel, act=act),
        out_shape=jax.ShapeDtypeStruct((m, n), x.dtype),
        grid=(1,),
        in_specs=[pl.BlockSpec((m, k), lambda i: (0, 0)),
                  pl.BlockSpec((k, n), lambda i: (0, 0)),
                  pl.BlockSpec((1, n), lambda i: (0, 0))],
        out_specs=pl.BlockSpec((m, n), lambda i: (0, 0)),
    )(x, w, b2)


def mlp_forward(x: jax.Array, params, *, tanh: bool) -> jax.Array:
    """MLP from the spec: [Linear+LipSwish] * num_layers, then Linear (+Tanh)."""
    h = x
    last = len(params) - 1
    for i, (w, b) in enumerate(params):
        if i < last:
            act = "lipswish"
        else:
            act = "tanh" if tanh else "none"
        h = linear_act(h, w, b, act)
    return h


# --------------------------------------------------------------------------- #
# Pure-JAX references & deterministic parameter init
# --------------------------------------------------------------------------- #
def _mlp_ref(x, params, tanh):
    h = x
    last = len(params) - 1
    for i, (w, b) in enumerate(params):
        h = jnp.dot(h, w) + b
        if i < last:
            h = 0.909 * jax.nn.silu(h)
        elif tanh:
            h = jnp.tanh(h)
    return h


def _init_mlp_params(key, in_size, out_size, mlp_size, num_layers):
    # torch MLP: Linear(in, mlp) + (num_layers-1) x Linear(mlp, mlp) + Linear(mlp, out)
    sizes = [in_size] + [mlp_size] * num_layers + [out_size]
    params = []
    for i in range(len(sizes) - 1):
        key, kw, kb = jax.random.split(key, 3)
        w = jax.random.normal(kw, (sizes[i], sizes[i + 1]), jnp.float32)
        w = w / jnp.sqrt(jnp.float32(sizes[i]))
        b = 0.1 * jax.random.normal(kb, (sizes[i + 1],), jnp.float32)
        params.append((w, b))
    return params


# --------------------------------------------------------------------------- #
if __name__ == "__main__":
    # Keep both the kernel dot and the reference dot in full f32 on the MXU so
    # the correctness comparison is tight.
    jax.config.update("jax_default_matmul_precision", "highest")

    key = jax.random.PRNGKey(0)
    batch_size = 2
    initial_noise_size = 8
    hidden_size = 4          # matches the hard-coded diffusion scale length (4)
    mlp_size = 32
    num_layers = 2

    k_noise, k_init, k_drift, k_scale, k_x4d = jax.random.split(key, 5)

    init_params = _init_mlp_params(k_init, initial_noise_size, hidden_size,
                                   mlp_size, num_layers)
    drift_params = _init_mlp_params(k_drift, hidden_size, hidden_size,
                                    mlp_size, num_layers)

    # Generator.forward: init_noise = randn(batch, initial_noise_size)
    # (host-side RNG in the wrapper, as in the original module).
    init_noise = jax.random.normal(k_noise, (batch_size, initial_noise_size),
                                   jnp.float32)

    # x0 = self._initial(init_noise)            (MLP, tanh=False)
    x0 = mlp_forward(init_noise, init_params, tanh=False)

    # Drift's MLP branch on the hidden state     (MLP, tanh=True)
    # TODO(synk): the LindxCouple(x, p, 0) oscillator term of Drift is an
    # undefined external op and is not implemented.
    drift_nn = mlp_forward(x0, drift_params, tanh=True)

    # GeneratorFunc diffusion: ScaleLinear(torch.tensor([1.,1.,1.,1.]))
    diff_scale = jnp.ones((hidden_size,), jnp.float32)
    g = scale_linear(x0, diff_scale)

    # Extra kernel coverage: scalar scale on a larger NCHW tensor (big slab,
    # multi-row tile) and a non-trivial per-channel scale (lane-tiled broadcast).
    x4d = jax.random.normal(k_x4d, (2, 4, 16, 16), jnp.float32)
    out_scalar = scale_linear(x4d, 0.7)
    vec_scale = jax.random.normal(k_scale, (hidden_size,), jnp.float32)
    out_vec = scale_linear(x0, vec_scale)

    for a in (x0, drift_nn, g, out_scalar, out_vec):
        jax.block_until_ready(a)

    # ---- correctness vs pure-JAX references ----------------------------------
    assert x0.shape == (batch_size, hidden_size) and x0.dtype == jnp.float32
    assert jnp.allclose(x0, _mlp_ref(init_noise, init_params, False),
                        atol=1e-4, rtol=1e-4)
    assert jnp.allclose(drift_nn, _mlp_ref(x0, drift_params, True),
                        atol=1e-4, rtol=1e-4)
    assert g.shape == x0.shape and g.dtype == x0.dtype
    assert jnp.allclose(g, diff_scale * x0, atol=1e-6, rtol=1e-6)
    assert out_scalar.shape == x4d.shape and out_scalar.dtype == x4d.dtype
    assert jnp.allclose(out_scalar, 0.7 * x4d, atol=1e-6, rtol=1e-6)
    assert jnp.allclose(out_vec, vec_scale * x0, atol=1e-6, rtol=1e-6)

    print("KERNEL_OK")
</pallas_src>

<mosaic_0001>
module attributes {stable_mosaic.version = 11 : i64} {
  func.func @_linear_act_kernel(%arg0: i32, %arg1: memref<2x8xf32, #tpu.memory_space<vmem>>, %arg2: memref<8x32xf32, #tpu.memory_space<vmem>>, %arg3: memref<1x32xf32, #tpu.memory_space<vmem>>, %arg4: memref<2x32xf32, #tpu.memory_space<vmem>>) attributes {dimension_semantics = [#tpu.dimension_semantics<arbitrary>], iteration_bounds = array<i64: 1>, scalar_prefetch = 0 : i64, scratch_operands = 0 : i64, tpu.core_type = #tpu.core_type<tc>, window_params = [{pipeline_mode = #tpu.pipeline_mode<synchronous>, transform_indices = @transform_0, window_bounds = array<i64: 2, 8>}, {pipeline_mode = #tpu.pipeline_mode<synchronous>, transform_indices = @transform_1, window_bounds = array<i64: 8, 32>}, {pipeline_mode = #tpu.pipeline_mode<synchronous>, transform_indices = @transform_2, window_bounds = array<i64: 1, 32>}, {pipeline_mode = #tpu.pipeline_mode<synchronous>, transform_indices = @transform_3, window_bounds = array<i64: 2, 32>}]} {
    %c0 = arith.constant 0 : index
    %c0_0 = arith.constant 0 : index
    %0 = vector.load %arg1[%c0, %c0_0] : memref<2x8xf32, #tpu.memory_space<vmem>>, vector<2x8xf32>
    %c0_1 = arith.constant 0 : index
    %c0_2 = arith.constant 0 : index
    %1 = vector.load %arg2[%c0_1, %c0_2] : memref<8x32xf32, #tpu.memory_space<vmem>>, vector<8x32xf32>
    %cst = arith.constant dense<0.000000e+00> : vector<2x32xf32>
    %2 = tpu.matmul %0, %1, %cst {dimension_numbers = #tpu.dot_dimension_numbers<[1], [0], [0], [1], [0, 0, 1, 1], [], []>, precision = #tpu.contract_precision<fp32>} : vector<2x8xf32>, vector<8x32xf32>, vector<2x32xf32> -> vector<2x32xf32>
    %c0_3 = arith.constant 0 : index
    %c0_4 = arith.constant 0 : index
    %3 = vector.load %arg3[%c0_3, %c0_4] : memref<1x32xf32, #tpu.memory_space<vmem>>, vector<1x32xf32>
    %4 = vector.broadcast %3 : vector<1x32xf32> to vector<2x32xf32>
    %5 = arith.addf %2, %4 : vector<2x32xf32>
    %6 = arith.negf %5 : vector<2x32xf32>
    %7 = math.exp %6 : vector<2x32xf32>
    %cst_5 = arith.constant 1.000000e+00 : f32
    %8 = vector.broadcast %cst_5 : f32 to vector<2x32xf32>
    %9 = arith.addf %8, %7 : vector<2x32xf32>
    %10 = arith.divf %8, %9 : vector<2x32xf32>
    %11 = arith.mulf %5, %10 : vector<2x32xf32>
    %cst_6 = arith.constant 0.908999979 : f32
    %12 = vector.broadcast %cst_6 : f32 to vector<2x32xf32>
    %13 = arith.mulf %12, %11 : vector<2x32xf32>
    %c0_7 = arith.constant 0 : index
    %c0_8 = arith.constant 0 : index
    %14 = vector.load %arg4[%c0_7, %c0_8] : memref<2x32xf32, #tpu.memory_space<vmem>>, vector<2x32xf32>
    tpu.vector_store %arg4[%c0_7, %c0_8], %13 {strides = array<i32>} : memref<2x32xf32, #tpu.memory_space<vmem>>, vector<2x32xf32>,
    return
  }
  func.func @transform_0(%arg0: i32) -> (i32, i32) {
    %c0_i32 = arith.constant 0 : i32
    %c0_i32_0 = arith.constant 0 : i32
    %c0_i32_1 = arith.constant 0 : i32
    return %c0_i32, %c0_i32_0 : i32, i32
  }
  func.func @transform_1(%arg0: i32) -> (i32, i32) {
    %c0_i32 = arith.constant 0 : i32
    %c0_i32_0 = arith.constant 0 : i32
    %c0_i32_1 = arith.constant 0 : i32
    return %c0_i32, %c0_i32_0 : i32, i32
  }
  func.func @transform_2(%arg0: i32) -> (i32, i32) {
    %c0_i32 = arith.constant 0 : i32
    %c0_i32_0 = arith.constant 0 : i32
    %c0_i32_1 = arith.constant 0 : i32
    return %c0_i32, %c0_i32_0 : i32, i32
  }
  func.func @transform_3(%arg0: i32) -> (i32, i32) {
    %c0_i32 = arith.constant 0 : i32
    %c0_i32_0 = arith.constant 0 : i32
    %c0_i32_1 = arith.constant 0 : i32
    return %c0_i32, %c0_i32_0 : i32, i32
  }
}

</mosaic_0001>

<llo_original>
// kernel: tpu_custom_call.1
$region0: #{tpu_custom_call.1}
  #allocation0 [shape = 'u32[]', space=smem, size = 0x4, offset = 0x4, fixed_abs, tag = 'smem constant byte address 0x4 - core index']
  #allocation1 [shape = 'u32[144,128]{1,0:T(1,128)}', space=vmem, size = 0x12000, scoped, tag = 'internal scratch']
  %s0 = inlined_call_operand.hbm [shape: f32[2,8], index: 0, kind: input, shape index: {}]
  %s1 = inlined_call_operand.hbm [shape: f32[8,32], index: 1, kind: input, shape index: {}]
  %s2 = inlined_call_operand.vmem [shape: f32[1,32], index: 2, kind: input, shape index: {}]
  %s3 = inlined_call_operand.hbm [shape: f32[2,32], index: 3, kind: output, shape index: {}]
  %s4 = sld [smem:[#allocation0]]
  $region30: #{tpu_custom_call.1} parent=0
    _
  %s6 = ssub.s32 1, %s4
  %s7 = scalar_select 0, %s6, %s4
  $region1: #{tpu_custom_call.1} parent=0
    #allocation2 [shape = 'u8[1024]{0}', space=vmem, size = 0x400, scoped, tag = 'input window, operand 0, single buffered']
    #allocation3 [shape = 's32[1]{0}', space=sflag, size = 0x4, scoped, tag = 'scoped memory for tpu_custom_call.1']
    #allocation4 [shape = 's32[1]{0}', space=sflag, size = 0x4, scoped, tag = 'scoped memory for tpu_custom_call.1']
    #allocation5 [shape = 'u8[4096]{0}', space=vmem, size = 0x1000, scoped, tag = 'input window, operand 1, single buffered']
    #allocation6 [shape = 's32[1]{0}', space=sflag, size = 0x4, scoped, tag = 'scoped memory for tpu_custom_call.1']
    #allocation7 [shape = 'u8[1024]{0}', space=vmem, size = 0x400, scoped, tag = 'output window, operand 0, single buffered']
    %8 = vsyncpa [#allocation3], 0
    %9 = vsyncpa [#allocation6], 0
    %10 = vsyncpa [#allocation4], 0
    // Predicated region
    $region2: #{tpu_custom_call.1} parent=1 // pred_check
      _
    $region3: #{tpu_custom_call.1} parent=1 // pred_check_branch
      %12 = sbr.rel (0) target = $region5
    $region4: #{tpu_custom_call.1} parent=1 // pred_region
      %s14 = ssub.s32 32, 32
      %15 = vsyncadd [#allocation3], %s14
      %s17 = sshll.u32 [#allocation2], 4
      %s18 = int_to_ptr.vmem [resolvable:$true] %s17
      %20 = dma.hbm_to_vmem [thread:$0]  %s0, 32, %s18, [#allocation3]
    $region5: #{tpu_custom_call.1} parent=1 // pred_fallthru
      _
    // Predicated region
    $region6: #{tpu_custom_call.1} parent=1 // pred_check
      _
    $region7: #{tpu_custom_call.1} parent=1 // pred_check_branch
      %22 = sbr.rel (0) target = $region9
    $region8: #{tpu_custom_call.1} parent=1 // pred_region
      %s24 = ssub.s32 128, 128
      %25 = vsyncadd [#allocation6], %s24
      %s27 = sshll.u32 [#allocation5], 4
      %s28 = int_to_ptr.vmem [resolvable:$true] %s27
      %30 = dma.hbm_to_vmem [thread:$0]  %s1, 128, %s28, [#allocation6]
    $region9: #{tpu_custom_call.1} parent=1 // pred_fallthru
      _
    // Predicated region
    $region10: #{tpu_custom_call.1} parent=1 // pred_check
      _
    $region11: #{tpu_custom_call.1} parent=1 // pred_check_branch
      %32 = sbr.rel (0) target = $region13
    $region12: #{tpu_custom_call.1} parent=1 // pred_region
      _
    $region13: #{tpu_custom_call.1} parent=1 // pred_fallthru
      _
    // Predicated region
    $region14: #{tpu_custom_call.1} parent=1 // pred_check
      _
    $region15: #{tpu_custom_call.1} parent=1 // pred_check_branch
      %34 = sbr.rel (0) target = $region17
    $region16: #{tpu_custom_call.1} parent=1 // pred_region
      %35 = dma.done [#allocation3], 32
    $region17: #{tpu_custom_call.1} parent=1 // pred_fallthru
      _
    // Predicated region
    $region18: #{tpu_custom_call.1} parent=1 // pred_check
      _
    $region19: #{tpu_custom_call.1} parent=1 // pred_check_branch
      %37 = sbr.rel (0) target = $region21
    $region20: #{tpu_custom_call.1} parent=1 // pred_region
      %38 = dma.done [#allocation6], 128
    $region21: #{tpu_custom_call.1} parent=1 // pred_fallthru
      _
    %v39 = vld [vmem:[#allocation2] sm:$0x3]
    %v40 = vld [vmem:[#allocation5] sm:$0xff]
    %v41 = vld [vmem:[%s2] sm:$0x1]
    %v43 = vlaneseq
    %v44 = vshrl.u32 %v43, 7
    %v45 = vsub.s32 0, %v44
    %v46 = vrot.slane %v41, %v45
    %vm48 = vcmask 64512
    %v50 = vsel %vm48, %v39, 0
    %52 = vmatprep.subr.mxu0 0.0
    %53 = vmatpush1.msra.mxu0 0.0
    %54 = vmatprep.subr.mxu0 0.0
    %55 = vmatpush1.msra.mxu0 0.0
    %56 = vmatprep.subr.mxu0 0.0
    %57 = vmatpush1.msra.mxu0 0.0
    %58 = vmatprep.subr.mxu0 0.0
    %59 = vmatpush1.msra.mxu0 0.0
    %60 = vmatprep.subr.mxu0 0.0
    %61 = vmatpush1.msra.mxu0 0.0
    %62 = vmatprep.subr.mxu0 0.0
    %63 = vmatpush1.msra.mxu0 0.0
    %64 = vmatprep.subr.mxu0 0.0
    %65 = vmatpush1.msra.mxu0 0.0
    %66 = vmatprep.subr.mxu0 0.0
    %67 = vmatpush1.msra.mxu0 0.0
    %68 = vmatprep.subr.mxu0 0.0
    %69 = vmatpush1.msra.mxu0 0.0
    %70 = vmatprep.subr.mxu0 0.0
    %71 = vmatpush1.msra.mxu0 0.0
    %72 = vmatprep.subr.mxu0 0.0
    %73 = vmatpush1.msra.mxu0 0.0
    %74 = vmatprep.subr.mxu0 0.0
    %75 = vmatpush1.msra.mxu0 0.0
    %76 = vmatprep.subr.mxu0 0.0
    %77 = vmatpush1.msra.mxu0 0.0
    %78 = vmatprep.subr.mxu0 0.0
    %79 = vmatpush1.msra.mxu0 0.0
    %80 = vmatprep.subr.mxu0 0.0
    %81 = vmatpush1.msra.mxu0 0.0
    %82 = vmatprep.subr.mxu0 0.0
    %v83 = vand.u32 %v40, 4294901760
    %84 = vmatpush1.msra.mxu0 %v83
    %85 = vmatprep.subr.mxu0 0.0
    %86 = vmatpush2.msra.mxu0 0.0
    %87 = vmatprep.subr.mxu0 0.0
    %88 = vmatpush2.msra.mxu0 0.0
    %89 = vmatprep.subr.mxu0 0.0
    %90 = vmatpush2.msra.mxu0 0.0
    %91 = vmatprep.subr.mxu0 0.0
    %92 = vmatpush2.msra.mxu0 0.0
    %93 = vmatprep.subr.mxu0 0.0
    %94 = vmatpush2.msra.mxu0 0.0
    %95 = vmatprep.subr.mxu0 0.0
    %96 = vmatpush2.msra.mxu0 0.0
    %97 = vmatprep.subr.mxu0 0.0
    %98 = vmatpush2.msra.mxu0 0.0
    %99 = vmatprep.subr.mxu0 0.0
    %100 = vmatpush2.msra.mxu0 0.0
    %101 = vmatprep.subr.mxu0 0.0
    %102 = vmatpush2.msra.mxu0 0.0
    %103 = vmatprep.subr.mxu0 0.0
    %104 = vmatpush2.msra.mxu0 0.0
    %105 = vmatprep.subr.mxu0 0.0
    %106 = vmatpush2.msra.mxu0 0.0
    %107 = vmatprep.subr.mxu0 0.0
    %108 = vmatpush2.msra.mxu0 0.0
    %109 = vmatprep.subr.mxu0 0.0
    %110 = vmatpush2.msra.mxu0 0.0
    %111 = vmatprep.subr.mxu0 0.0
    %112 = vmatpush2.msra.mxu0 0.0
    %113 = vmatprep.subr.mxu0 0.0
    %114 = vmatpush2.msra.mxu0 0.0
    %115 = vmatprep.subr.mxu0 0.0
    %116 = vmatpush2.msra.mxu0 0.0
    %117 = vmatprep.mubr.f32.mxu0 0.0
    %v118 = vand.u32 %v50, 4294901760
    %v119 = vsub.f32 %v50, %v118
    %v120 = vand.u32 %v119, 4294901760
    %v121 = vsub.f32 %v119, %v120
    %v122 = vand.u32 %v121, 4294901760
    %123 = vmatmul.mubr.f32.gmra.mxu0 %v122
    %v124 = vpop.f32.mrf.mxu0
    %v125 = vadd.f32 %v46, %v124
    %v126 = vpop.f32.mrf.mxu0
    %127 = vdwg.mxu0
    %128 = vmatprep.subr.mxu0 0.0
    %129 = vmatpush1.msra.mxu0 0.0
    %130 = vmatprep.subr.mxu0 0.0
    %131 = vmatpush1.msra.mxu0 0.0
    %132 = vmatprep.subr.mxu0 0.0
    %133 = vmatpush1.msra.mxu0 0.0
    %134 = vmatprep.subr.mxu0 0.0
    %135 = vmatpush1.msra.mxu0 0.0
    %136 = vmatprep.subr.mxu0 0.0
    %137 = vmatpush1.msra.mxu0 0.0
    %138 = vmatprep.subr.mxu0 0.0
    %139 = vmatpush1.msra.mxu0 0.0
    %140 = vmatprep.subr.mxu0 0.0
    %141 = vmatpush1.msra.mxu0 0.0
    %142 = vmatprep.subr.mxu0 0.0
    %143 = vmatpush1.msra.mxu0 0.0
    %144 = vmatprep.subr.mxu0 0.0
    %145 = vmatpush1.msra.mxu0 0.0
    %146 = vmatprep.subr.mxu0 0.0
    %147 = vmatpush1.msra.mxu0 0.0
    %148 = vmatprep.subr.mxu0 0.0
    %149 = vmatpush1.msra.mxu0 0.0
    %150 = vmatprep.subr.mxu0 0.0
    %151 = vmatpush1.msra.mxu0 0.0
    %152 = vmatprep.subr.mxu0 0.0
    %153 = vmatpush1.msra.mxu0 0.0
    %154 = vmatprep.subr.mxu0 0.0
    %155 = vmatpush1.msra.mxu0 0.0
    %156 = vmatprep.subr.mxu0 0.0
    %157 = vmatpush1.msra.mxu0 0.0
    %158 = vmatprep.subr.mxu0 0.0
    %v159 = vand.u32 %v40, 4294901760
    %v160 = vsub.f32 %v40, %v159
    %v161 = vand.u32 %v160, 4294901760
    %v162 = vsub.f32 %v160, %v161
    %v163 = vand.u32 %v162, 4294901760
    %164 = vmatpush1.msra.mxu0 %v163
    %165 = vmatprep.subr.mxu0 0.0
    %166 = vmatpush2.msra.mxu0 0.0
    %167 = vmatprep.subr.mxu0 0.0
    %168 = vmatpush2.msra.mxu0 0.0
    %169 = vmatprep.subr.mxu0 0.0
    %170 = vmatpush2.msra.mxu0 0.0
    %171 = vmatprep.subr.mxu0 0.0
    %172 = vmatpush2.msra.mxu0 0.0
    %173 = vmatprep.subr.mxu0 0.0
    %174 = vmatpush2.msra.mxu0 0.0
    %175 = vmatprep.subr.mxu0 0.0
    %176 = vmatpush2.msra.mxu0 0.0
    %177 = vmatprep.subr.mxu0 0.0
    %178 = vmatpush2.msra.mxu0 0.0
    %179 = vmatprep.subr.mxu0 0.0
    %180 = vmatpush2.msra.mxu0 0.0
    %181 = vmatprep.subr.mxu0 0.0
    %182 = vmatpush2.msra.mxu0 0.0
    %183 = vmatprep.subr.mxu0 0.0
    %184 = vmatpush2.msra.mxu0 0.0
    %185 = vmatprep.subr.mxu0 0.0
    %186 = vmatpush2.msra.mxu0 0.0
    %187 = vmatprep.subr.mxu0 0.0
    %188 = vmatpush2.msra.mxu0 0.0
    %189 = vmatprep.subr.mxu0 0.0
    %190 = vmatpush2.msra.mxu0 0.0
    %191 = vmatprep.subr.mxu0 0.0
    %192 = vmatpush2.msra.mxu0 0.0
    %193 = vmatprep.subr.mxu0 0.0
    %194 = vmatpush2.msra.mxu0 0.0
    %195 = vmatprep.subr.mxu0 0.0
    %196 = vmatpush2.msra.mxu0 0.0
    %197 = vmatprep.mubr.f32.mxu0 0.0
    %v198 = vand.u32 %v50, 4294901760
    %199 = vmatmul.mubr.f32.gmra.mxu0 %v198
    %v200 = vpop.f32.mrf.mxu0
    %v201 = vadd.f32 %v125, %v200
    %v202 = vpop.f32.mrf.mxu0
    %203 = vdwg.mxu0
    %204 = vmatprep.subr.mxu0 0.0
    %205 = vmatpush1.msra.mxu0 0.0
    %206 = vmatprep.subr.mxu0 0.0
    %207 = vmatpush1.msra.mxu0 0.0
    %208 = vmatprep.subr.mxu0 0.0
    %209 = vmatpush1.msra.mxu0 0.0
    %210 = vmatprep.subr.mxu0 0.0
    %211 = vmatpush1.msra.mxu0 0.0
    %212 = vmatprep.subr.mxu0 0.0
    %213 = vmatpush1.msra.mxu0 0.0
    %214 = vmatprep.subr.mxu0 0.0
    %215 = vmatpush1.msra.mxu0 0.0
    %216 = vmatprep.subr.mxu0 0.0
    %217 = vmatpush1.msra.mxu0 0.0
    %218 = vmatprep.subr.mxu0 0.0
    %219 = vmatpush1.msra.mxu0 0.0
    %220 = vmatprep.subr.mxu0 0.0
    %221 = vmatpush1.msra.mxu0 0.0
    %222 = vmatprep.subr.mxu0 0.0
    %223 = vmatpush1.msra.mxu0 0.0
    %224 = vmatprep.subr.mxu0 0.0
    %225 = vmatpush1.msra.mxu0 0.0
    %226 = vmatprep.subr.mxu0 0.0
    %227 = vmatpush1.msra.mxu0 0.0
    %228 = vmatprep.subr.mxu0 0.0
    %229 = vmatpush1.msra.mxu0 0.0
    %230 = vmatprep.subr.mxu0 0.0
    %231 = vmatpush1.msra.mxu0 0.0
    %232 = vmatprep.subr.mxu0 0.0
    %233 = vmatpush1.msra.mxu0 0.0
    %234 = vmatprep.subr.mxu0 0.0
    %v235 = vand.u32 %v40, 4294901760
    %v236 = vsub.f32 %v40, %v235
    %237 = vmatpush1.msra.mxu0 %v236
    %238 = vmatprep.subr.mxu0 0.0
    %239 = vmatpush2.msra.mxu0 0.0
    %240 = vmatprep.subr.mxu0 0.0
    %241 = vmatpush2.msra.mxu0 0.0
    %242 = vmatprep.subr.mxu0 0.0
    %243 = vmatpush2.msra.mxu0 0.0
    %244 = vmatprep.subr.mxu0 0.0
    %245 = vmatpush2.msra.mxu0 0.0
    %246 = vmatprep.subr.mxu0 0.0
    %247 = vmatpush2.msra.mxu0 0.0
    %248 = vmatprep.subr.mxu0 0.0
    %249 = vmatpush2.msra.mxu0 0.0
    %250 = vmatprep.subr.mxu0 0.0
    %251 = vmatpush2.msra.mxu0 0.0
    %252 = vmatprep.subr.mxu0 0.0
    %253 = vmatpush2.msra.mxu0 0.0
    %254 = vmatprep.subr.mxu0 0.0
    %255 = vmatpush2.msra.mxu0 0.0
    %256 = vmatprep.subr.mxu0 0.0
    %257 = vmatpush2.msra.mxu0 0.0
    %258 = vmatprep.subr.mxu0 0.0
    %259 = vmatpush2.msra.mxu0 0.0
    %260 = vmatprep.subr.mxu0 0.0
    %261 = vmatpush2.msra.mxu0 0.0
    %262 = vmatprep.subr.mxu0 0.0
    %263 = vmatpush2.msra.mxu0 0.0
    %264 = vmatprep.subr.mxu0 0.0
    %265 = vmatpush2.msra.mxu0 0.0
    %266 = vmatprep.subr.mxu0 0.0
    %267 = vmatpush2.msra.mxu0 0.0
    %268 = vmatprep.subr.mxu0 0.0
    %269 = vmatpush2.msra.mxu0 0.0
    %270 = vmatprep.mubr.f32.mxu0 0.0
    %v271 = vand.u32 %v50, 4294901760
    %v272 = vsub.f32 %v50, %v271
    %273 = vmatmul.mubr.f32.gmra.mxu0 %v272
    %v274 = vpop.f32.mrf.mxu0
    %v275 = vadd.f32 %v201, %v274
    %v276 = vpop.f32.mrf.mxu0
    %277 = vdwg.mxu0
    %278 = vmatprep.subr.mxu0 0.0
    %279 = vmatpush1.msra.mxu0 0.0
    %280 = vmatprep.subr.mxu0 0.0
    %281 = vmatpush1.msra.mxu0 0.0
    %282 = vmatprep.subr.mxu0 0.0
    %283 = vmatpush1.msra.mxu0 0.0
    %284 = vmatprep.subr.mxu0 0.0
    %285 = vmatpush1.msra.mxu0 0.0
    %286 = vmatprep.subr.mxu0 0.0
    %287 = vmatpush1.msra.mxu0 0.0
    %288 = vmatprep.subr.mxu0 0.0
    %289 = vmatpush1.msra.mxu0 0.0
    %290 = vmatprep.subr.mxu0 0.0
    %291 = vmatpush1.msra.mxu0 0.0
    %292 = vmatprep.subr.mxu0 0.0
    %293 = vmatpush1.msra.mxu0 0.0
    %294 = vmatprep.subr.mxu0 0.0
    %295 = vmatpush1.msra.mxu0 0.0
    %296 = vmatprep.subr.mxu0 0.0
    %297 = vmatpush1.msra.mxu0 0.0
    %298 = vmatprep.subr.mxu0 0.0
    %299 = vmatpush1.msra.mxu0 0.0
    %300 = vmatprep.subr.mxu0 0.0
    %301 = vmatpush1.msra.mxu0 0.0
    %302 = vmatprep.subr.mxu0 0.0
    %303 = vmatpush1.msra.mxu0 0.0
    %304 = vmatprep.subr.mxu0 0.0
    %305 = vmatpush1.msra.mxu0 0.0
    %306 = vmatprep.subr.mxu0 0.0
    %307 = vmatpush1.msra.mxu0 0.0
    %308 = vmatprep.subr.mxu0 0.0
    %v309 = vand.u32 %v40, 4294901760
    %310 = vmatpush1.msra.mxu0 %v309
    %311 = vmatprep.subr.mxu0 0.0
    %312 = vmatpush2.msra.mxu0 0.0
    %313 = vmatprep.subr.mxu0 0.0
    %314 = vmatpush2.msra.mxu0 0.0
    %315 = vmatprep.subr.mxu0 0.0
    %316 = vmatpush2.msra.mxu0 0.0
    %317 = vmatprep.subr.mxu0 0.0
    %318 = vmatpush2.msra.mxu0 0.0
    %319 = vmatprep.subr.mxu0 0.0
    %320 = vmatpush2.msra.mxu0 0.0
    %321 = vmatprep.subr.mxu0 0.0
    %322 = vmatpush2.msra.mxu0 0.0
    %323 = vmatprep.subr.mxu0 0.0
    %324 = vmatpush2.msra.mxu0 0.0
    %325 = vmatprep.subr.mxu0 0.0
    %326 = vmatpush2.msra.mxu0 0.0
    %327 = vmatprep.subr.mxu0 0.0
    %328 = vmatpush2.msra.mxu0 0.0
    %329 = vmatprep.subr.mxu0 0.0
    %330 = vmatpush2.msra.mxu0 0.0
    %331 = vmatprep.subr.mxu0 0.0
    %332 = vmatpush2.msra.mxu0 0.0
    %333 = vmatprep.subr.mxu0 0.0
    %334 = vmatpush2.msra.mxu0 0.0
    %335 = vmatprep.subr.mxu0 0.0
    %336 = vmatpush2.msra.mxu0 0.0
    %337 = vmatprep.subr.mxu0 0.0
    %338 = vmatpush2.msra.mxu0 0.0
    %339 = vmatprep.subr.mxu0 0.0
    %340 = vmatpush2.msra.mxu0 0.0
    %341 = vmatprep.subr.mxu0 0.0
    %342 = vmatpush2.msra.mxu0 0.0
    %343 = vmatprep.mubr.f32.mxu0 0.0
    %v344 = vand.u32 %v50, 4294901760
    %v345 = vsub.f32 %v50, %v344
    %v346 = vand.u32 %v345, 4294901760
    %347 = vmatmul.mubr.f32.gmra.mxu0 %v346
    %v348 = vpop.f32.mrf.mxu0
    %v349 = vadd.f32 %v275, %v348
    %v350 = vpop.f32.mrf.mxu0
    %351 = vdwg.mxu0
    %352 = vmatprep.subr.mxu0 0.0
    %353 = vmatpush1.msra.mxu0 0.0
    %354 = vmatprep.subr.mxu0 0.0
    %355 = vmatpush1.msra.mxu0 0.0
    %356 = vmatprep.subr.mxu0 0.0
    %357 = vmatpush1.msra.mxu0 0.0
    %358 = vmatprep.subr.mxu0 0.0
    %359 = vmatpush1.msra.mxu0 0.0
    %360 = vmatprep.subr.mxu0 0.0
    %361 = vmatpush1.msra.mxu0 0.0
    %362 = vmatprep.subr.mxu0 0.0
    %363 = vmatpush1.msra.mxu0 0.0
    %364 = vmatprep.subr.mxu0 0.0
    %365 = vmatpush1.msra.mxu0 0.0
    %366 = vmatprep.subr.mxu0 0.0
    %367 = vmatpush1.msra.mxu0 0.0
    %368 = vmatprep.subr.mxu0 0.0
    %369 = vmatpush1.msra.mxu0 0.0
    %370 = vmatprep.subr.mxu0 0.0
    %371 = vmatpush1.msra.mxu0 0.0
    %372 = vmatprep.subr.mxu0 0.0
    %373 = vmatpush1.msra.mxu0 0.0
    %374 = vmatprep.subr.mxu0 0.0
    %375 = vmatpush1.msra.mxu0 0.0
    %376 = vmatprep.subr.mxu0 0.0
    %377 = vmatpush1.msra.mxu0 0.0
    %378 = vmatprep.subr.mxu0 0.0
    %379 = vmatpush1.msra.mxu0 0.0
    %380 = vmatprep.subr.mxu0 0.0
    %381 = vmatpush1.msra.mxu0 0.0
    %382 = vmatprep.subr.mxu0 0.0
    %v383 = vand.u32 %v40, 4294901760
    %v384 = vsub.f32 %v40, %v383
    %v385 = vand.u32 %v384, 4294901760
    %386 = vmatpush1.msra.mxu0 %v385
    %387 = vmatprep.subr.mxu0 0.0
    %388 = vmatpush2.msra.mxu0 0.0
    %389 = vmatprep.subr.mxu0 0.0
    %390 = vmatpush2.msra.mxu0 0.0
    %391 = vmatprep.subr.mxu0 0.0
    %392 = vmatpush2.msra.mxu0 0.0
    %393 = vmatprep.subr.mxu0 0.0
    %394 = vmatpush2.msra.mxu0 0.0
    %395 = vmatprep.subr.mxu0 0.0
    %396 = vmatpush2.msra.mxu0 0.0
    %397 = vmatprep.subr.mxu0 0.0
    %398 = vmatpush2.msra.mxu0 0.0
    %399 = vmatprep.subr.mxu0 0.0
    %400 = vmatpush2.msra.mxu0 0.0
    %401 = vmatprep.subr.mxu0 0.0
    %402 = vmatpush2.msra.mxu0 0.0
    %403 = vmatprep.subr.mxu0 0.0
    %404 = vmatpush2.msra.mxu0 0.0
    %405 = vmatprep.subr.mxu0 0.0
    %406 = vmatpush2.msra.mxu0 0.0
    %407 = vmatprep.subr.mxu0 0.0
    %408 = vmatpush2.msra.mxu0 0.0
    %409 = vmatprep.subr.mxu0 0.0
    %410 = vmatpush2.msra.mxu0 0.0
    %411 = vmatprep.subr.mxu0 0.0
    %412 = vmatpush2.msra.mxu0 0.0
    %413 = vmatprep.subr.mxu0 0.0
    %414 = vmatpush2.msra.mxu0 0.0
    %415 = vmatprep.subr.mxu0 0.0
    %416 = vmatpush2.msra.mxu0 0.0
    %417 = vmatprep.subr.mxu0 0.0
    %418 = vmatpush2.msra.mxu0 0.0
    %419 = vmatprep.mubr.f32.mxu0 0.0
    %v420 = vand.u32 %v50, 4294901760
    %421 = vmatmul.mubr.f32.gmra.mxu0 %v420
    %v422 = vpop.f32.mrf.mxu0
    %v423 = vadd.f32 %v349, %v422
    %v424 = vpop.f32.mrf.mxu0
    %425 = vdwg.mxu0
    %426 = vmatprep.subr.mxu0 0.0
    %427 = vmatpush1.msra.mxu0 0.0
    %428 = vmatprep.subr.mxu0 0.0
    %429 = vmatpush1.msra.mxu0 0.0
    %430 = vmatprep.subr.mxu0 0.0
    %431 = vmatpush1.msra.mxu0 0.0
    %432 = vmatprep.subr.mxu0 0.0
    %433 = vmatpush1.msra.mxu0 0.0
    %434 = vmatprep.subr.mxu0 0.0
    %435 = vmatpush1.msra.mxu0 0.0
    %436 = vmatprep.subr.mxu0 0.0
    %437 = vmatpush1.msra.mxu0 0.0
    %438 = vmatprep.subr.mxu0 0.0
    %439 = vmatpush1.msra.mxu0 0.0
    %440 = vmatprep.subr.mxu0 0.0
    %441 = vmatpush1.msra.mxu0 0.0
    %442 = vmatprep.subr.mxu0 0.0
    %443 = vmatpush1.msra.mxu0 0.0
    %444 = vmatprep.subr.mxu0 0.0
    %445 = vmatpush1.msra.mxu0 0.0
    %446 = vmatprep.subr.mxu0 0.0
    %447 = vmatpush1.msra.mxu0 0.0
    %448 = vmatprep.subr.mxu0 0.0
    %449 = vmatpush1.msra.mxu0 0.0
    %450 = vmatprep.subr.mxu0 0.0
    %451 = vmatpush1.msra.mxu0 0.0
    %452 = vmatprep.subr.mxu0 0.0
    %453 = vmatpush1.msra.mxu0 0.0
    %454 = vmatprep.subr.mxu0 0.0
    %455 = vmatpush1.msra.mxu0 0.0
    %456 = vmatprep.subr.mxu0 0.0
    %v457 = vand.u32 %v40, 4294901760
    %458 = vmatpush1.msra.mxu0 %v457
    %459 = vmatprep.subr.mxu0 0.0
    %460 = vmatpush2.msra.mxu0 0.0
    %461 = vmatprep.subr.mxu0 0.0
    %462 = vmatpush2.msra.mxu0 0.0
    %463 = vmatprep.subr.mxu0 0.0
    %464 = vmatpush2.msra.mxu0 0.0
    %465 = vmatprep.subr.mxu0 0.0
    %466 = vmatpush2.msra.mxu0 0.0
    %467 = vmatprep.subr.mxu0 0.0
    %468 = vmatpush2.msra.mxu0 0.0
    %469 = vmatprep.subr.mxu0 0.0
    %470 = vmatpush2.msra.mxu0 0.0
    %471 = vmatprep.subr.mxu0 0.0
    %472 = vmatpush2.msra.mxu0 0.0
    %473 = vmatprep.subr.mxu0 0.0
    %474 = vmatpush2.msra.mxu0 0.0
    %475 = vmatprep.subr.mxu0 0.0
    %476 = vmatpush2.msra.mxu0 0.0
    %477 = vmatprep.subr.mxu0 0.0
    %478 = vmatpush2.msra.mxu0 0.0
    %479 = vmatprep.subr.mxu0 0.0
    %480 = vmatpush2.msra.mxu0 0.0
    %481 = vmatprep.subr.mxu0 0.0
    %482 = vmatpush2.msra.mxu0 0.0
    %483 = vmatprep.subr.mxu0 0.0
    %484 = vmatpush2.msra.mxu0 0.0
    %485 = vmatprep.subr.mxu0 0.0
    %486 = vmatpush2.msra.mxu0 0.0
    %487 = vmatprep.subr.mxu0 0.0
    %488 = vmatpush2.msra.mxu0 0.0
    %489 = vmatprep.subr.mxu0 0.0
    %490 = vmatpush2.msra.mxu0 0.0
    %491 = vmatprep.mubr.f32.mxu0 0.0
    %v492 = vand.u32 %v50, 4294901760
    %493 = vmatmul.mubr.f32.gmra.mxu0 %v492
    %v494 = vpop.f32.mrf.mxu0
    %v495 = vadd.f32 %v423, %v494
    %v496 = vpop.f32.mrf.mxu0
    %497 = vdwg.mxu0
    %v498 = vxor.u32 %v495, 2147483648
    %v499 = vmul.f32 %v498, 1.442695
    %v500 = vpow.pop %v499
    %v501 = vadd.f32 %v500, 1.0
    %v502 = vrcp.pop %v501
    %v503 = vmul.f32 1.0, %v502
    %v504 = vmul.f32 %v495, %v503
    %v505 = vmul.f32 %v504, 0.909
    %vm506 = vcmask 254976
    %507 = vst.msk [vmem:[#allocation7] sm:$0x3] %vm506, %v505
    // Predicated region
    $region22: #{tpu_custom_call.1} parent=1 // pred_check
      _
    $region23: #{tpu_custom_call.1} parent=1 // pred_check_branch
      %509 = sbr.rel (0) target = $region25
    $region24: #{tpu_custom_call.1} parent=1 // pred_region
      %s511 = ssub.s32 32, 32
      %512 = vsyncadd [#allocation4], %s511
      %s514 = sshll.u32 [#allocation7], 4
      %s515 = int_to_ptr.vmem [resolvable:$true] %s514
      %517 = dma.vmem_to_hbm [thread:$0]  %s515, 32, %s3, [#allocation4]
    $region25: #{tpu_custom_call.1} parent=1 // pred_fallthru
      _
    // Predicated region
    $region26: #{tpu_custom_call.1} parent=1 // pred_check
      _
    $region27: #{tpu_custom_call.1} parent=1 // pred_check_branch
      %519 = sbr.rel (0) target = $region29
    $region28: #{tpu_custom_call.1} parent=1 // pred_region
      %520 = dma.done [#allocation4], 32
    $region29: #{tpu_custom_call.1} parent=1 // pred_fallthru
      _
    %521 = vsyncpa [#allocation3], 1
    %522 = vsyncpa [#allocation6], 1
    %523 = vsyncpa [#allocation4], 1

</llo_original>
